<compile_context>
chip_gen: v6e
topology: v6e:2x2x1
jax: 0.10.0
libtpu: 0.0.40
codegen_flags: <defaults>
</compile_context>

<pallas_src>
import jax
import jax.numpy as jnp
from jax.experimental import pallas as pl
from jax.experimental.pallas import tpu as pltpu

H = 256          # conv "height" axis (kernel size 1 -> untouched), maps to lanes
W = 32           # conv "width" axis (strided convs act here)
LATENT_DIM = 32
FC_DIM = 256


def _round_up(n, m):
    return ((n + m - 1) // m) * m


def _choose_block(b8):
    """Batch-block size: multiple of 8 (16+ for bf16 sublane packing), capped
    at 128, and guaranteeing >=2 grid steps whenever the batch allows it
    (pipelining + both TCs on v7x)."""
    if b8 <= 16:
        return b8
    for cand in (128, 64, 32, 16):
        if b8 >= 2 * cand:
            return cand
    return 16


# --------------------------------------------------------------------------
# Pallas kernel: conv stages 3-5 + FC(256,256)+ReLU + fused mu/logvar head.
# --------------------------------------------------------------------------
def _encoder_tail_kernel(cwb_ref, x_ref, wfc_ref, bfc_ref, wh_ref, bh_ref, out_ref):
    """Process one batch block of NB samples.

    cwb_ref : SMEM (12,)   packed [w0, w1, w2, bias] for conv stages 3, 4, 5.
    x_ref   : (8, NB, 256) bf16 stage-2 conv output, W-major (H on lanes).
    wfc_ref : (256, 256)   bf16 transposed Linear(256,256) weight.
    bfc_ref : (1, 256)     f32 bias.
    wh_ref  : (256, C)     bf16 fused [mu | logvar | zero-pad] head weight.
    bh_ref  : (1, C)       f32 fused head bias.
    out_ref : (NB, C)      f32 fused [mu | logvar | pad] result.
    """
    def taps(k):
        return (cwb_ref[4 * k + 0], cwb_ref[4 * k + 1],
                cwb_ref[4 * k + 2], cwb_ref[4 * k + 3])

    # Upcast once; the remaining conv tail (7 output tiles) is cheap in f32.
    vals = [x_ref[w].astype(jnp.float32) for w in range(8)]

    # Conv stages 3-5 (W: 8 -> 4 -> 2 -> 1), kept as SSA values: no scratch
    # round trips, so no extra vector-store pressure (v5e has 1 vst slot).
    for k in range(3):
        c0, c1, c2, cb = taps(k)
        nxt = []
        for v in range(len(vals) // 2):
            acc = c1 * vals[2 * v] + c2 * vals[2 * v + 1] + cb
            if v > 0:                        # left tap; v == 0 hits the zero pad
                acc = acc + c0 * vals[2 * v - 1]
            nxt.append(jnp.maximum(acc, 0.0))
        vals = nxt

    flat = vals[0]                            # (NB, 256) f32, H on lanes
    h = jnp.dot(flat.astype(jnp.bfloat16), wfc_ref[...],
                preferred_element_type=jnp.float32) + bfc_ref[...]
    h = jnp.maximum(h, 0.0)
    out_ref[...] = (jnp.dot(h.astype(jnp.bfloat16), wh_ref[...],
                            preferred_element_type=jnp.float32) + bh_ref[...])


# --------------------------------------------------------------------------
# XLA pre-pass helper: one Conv2d(1,1,(1,3),stride=(1,2),pad=(0,1)) + ReLU
# along the last axis, expressed as even/odd taps so XLA fuses it with the
# HBM read of x.
# --------------------------------------------------------------------------
def _conv_stage(y, taps4):
    w_in = y.shape[-1]
    yr = y.reshape(y.shape[:-1] + (w_in // 2, 2))
    e, o = yr[..., 0], yr[..., 1]                          # x[2v], x[2v+1]
    om1 = jnp.concatenate([jnp.zeros_like(o[..., :1]), o[..., :-1]], axis=-1)  # x[2v-1]
    return jax.nn.relu(taps4[0] * om1 + taps4[1] * e + taps4[2] * o + taps4[3])


def pack_params(params):
    """One-time parameter packing (hoisted out of the forward path; reuse the
    result across calls)."""
    conv_ws, conv_bs, wfc, bfc, wmu, bmu, wlv, blv = params
    cw = jnp.stack([jnp.asarray(w, jnp.float32).reshape(3) for w in conv_ws])  # (5,3)
    cb = jnp.asarray(conv_bs, jnp.float32).reshape(5, 1)                       # (5,1)
    cwb = jnp.concatenate([cw, cb], axis=1)                                    # (5,4)
    conv12 = cwb[:2]                        # stages 1-2: XLA pre-pass
    cwb345 = cwb[2:].reshape(12)            # stages 3-5: SMEM scalars

    wfc_t = jnp.asarray(wfc, jnp.float32).T.astype(jnp.bfloat16)               # (256,256)
    bfc2 = jnp.asarray(bfc, jnp.float32).reshape(1, FC_DIM)

    L = wmu.shape[0]
    out_cols = max(128, _round_up(2 * L, 128))     # lane-dense fused head
    whf = jnp.zeros((FC_DIM, out_cols), jnp.float32)
    whf = whf.at[:, :L].set(jnp.asarray(wmu, jnp.float32).T)
    whf = whf.at[:, L:2 * L].set(jnp.asarray(wlv, jnp.float32).T)
    wh = whf.astype(jnp.bfloat16)
    bh = jnp.zeros((1, out_cols), jnp.float32)
    bh = bh.at[0, :L].set(jnp.asarray(bmu, jnp.float32))
    bh = bh.at[0, L:2 * L].set(jnp.asarray(blv, jnp.float32))
    return (conv12, cwb345, wfc_t, bfc2, wh, bh)


def encoder_forward(x, packed, latent_dim=LATENT_DIM):
    """x: (B, 1, 256, 32) float32 (NCHW).  Returns (mu, logvar), each (B, latent)."""
    conv12, cwb345, wfc_t, bfc2, wh, bh = packed
    B = x.shape[0]
    assert x.shape[1:] == (1, H, W)
    out_cols = wh.shape[1]

    B8 = _round_up(max(B, 1), 8)
    NB = _choose_block(B8)
    B_pad = _round_up(B8, NB)

    # Pre-pass: conv stages 1-2 in f32 (fused by XLA with the single read of x),
    # cast to bf16, then one small transpose to the W-major layout the kernel
    # consumes.  The streamed kernel input is (8, B, 256) bf16 instead of the
    # full (32, B, 256) f32.
    y = x.reshape(B, H, W).astype(jnp.float32)
    y = _conv_stage(y, conv12[0])                      # (B, 256, 16)
    y = _conv_stage(y, conv12[1])                      # (B, 256, 8)
    xw = jnp.transpose(y.astype(jnp.bfloat16), (2, 0, 1))   # (8, B, 256)
    if B_pad != B:
        xw = jnp.pad(xw, ((0, 0), (0, B_pad - B), (0, 0)))

    out = pl.pallas_call(
        _encoder_tail_kernel,
        grid=(B_pad // NB,),
        in_specs=[
            pl.BlockSpec(memory_space=pltpu.MemorySpace.SMEM),       # cwb345 (12,)
            pl.BlockSpec((8, NB, H), lambda b: (0, b, 0)),           # xw, W-major
            pl.BlockSpec((FC_DIM, FC_DIM), lambda b: (0, 0)),        # wfc^T (bf16)
            pl.BlockSpec((1, FC_DIM), lambda b: (0, 0)),             # bfc
            pl.BlockSpec((FC_DIM, out_cols), lambda b: (0, 0)),      # fused head W (bf16)
            pl.BlockSpec((1, out_cols), lambda b: (0, 0)),           # fused head b
        ],
        out_specs=pl.BlockSpec((NB, out_cols), lambda b: (b, 0)),
        out_shape=jax.ShapeDtypeStruct((B_pad, out_cols), jnp.float32),
        compiler_params=pltpu.CompilerParams(
            dimension_semantics=("parallel",)),
    )(cwb345, xw, wfc_t, bfc2, wh, bh)

    mu = out[:B, :latent_dim]
    logvar = out[:B, latent_dim:2 * latent_dim]
    return mu, logvar


def reference_forward(x, params):
    """Pure-JAX f32 reference reproducing the PyTorch forward (NCHW)."""
    conv_ws, conv_bs, wfc, bfc, wmu, bmu, wlv, blv = params
    B = x.shape[0]
    y = x
    for w3, b in zip(conv_ws, conv_bs):
        k = jnp.asarray(w3, jnp.float32).reshape(1, 1, 1, 3)  # OIHW
        y = jax.lax.conv_general_dilated(
            y, k, window_strides=(1, 2), padding=((0, 0), (1, 1)),
            dimension_numbers=("NCHW", "OIHW", "NCHW"))
        y = jax.nn.relu(y + b)
    flat = y.reshape(B, FC_DIM)
    h = jax.nn.relu(flat @ wfc.T + bfc)
    mu = h @ wmu.T + bmu
    lv = h @ wlv.T + blv
    return mu, lv


def make_params(key, latent_dim=LATENT_DIM):
    keys = jax.random.split(key, 12)
    conv_ws = [0.5 * jax.random.normal(keys[i], (3,), jnp.float32) for i in range(5)]
    conv_bs = 0.1 * jax.random.normal(keys[5], (5,), jnp.float32)
    wfc = jax.random.normal(keys[6], (FC_DIM, FC_DIM), jnp.float32) / 16.0
    bfc = 0.1 * jax.random.normal(keys[7], (FC_DIM,), jnp.float32)
    wmu = jax.random.normal(keys[8], (latent_dim, FC_DIM), jnp.float32) / 16.0
    bmu = 0.1 * jax.random.normal(keys[9], (latent_dim,), jnp.float32)
    wlv = jax.random.normal(keys[10], (latent_dim, FC_DIM), jnp.float32) / 16.0
    blv = 0.1 * jax.random.normal(keys[11], (latent_dim,), jnp.float32)
    return (conv_ws, conv_bs, wfc, bfc, wmu, bmu, wlv, blv)


if __name__ == "__main__":
    B = 2
    key = jax.random.PRNGKey(0)
    kp, kx = jax.random.split(key)
    params = make_params(kp)
    packed = pack_params(params)      # hoisted: packed once, reused per call
    # Module asserts x[0].size() == (1, 256, 32) -> NCHW input (B, 1, 256, 32).
    x = jax.random.normal(kx, (B, 1, H, W), jnp.float32)

    fwd = jax.jit(lambda xx: encoder_forward(xx, packed))
    mu, logvar = fwd(x)
    jax.block_until_ready((mu, logvar))

    mu_ref, lv_ref = reference_forward(x, params)
    assert mu.shape == (B, LATENT_DIM) and logvar.shape == (B, LATENT_DIM)
    # bf16 streaming / bf16 MXU weights -> slightly looser tolerance than pure f32.
    assert jnp.allclose(mu, mu_ref, atol=1e-2, rtol=1e-2), "mu mismatch"
    assert jnp.allclose(logvar, lv_ref, atol=1e-2, rtol=1e-2), "logvar mismatch"
    print("KERNEL_OK")
</pallas_src>

<mosaic_0001>
module attributes {stable_mosaic.version = 11 : i64} {
  func.func @_encoder_tail_kernel(%arg0: i32, %arg1: memref<12xf32, #tpu.memory_space<smem>>, %arg2: memref<8x8x256xbf16, #tpu.memory_space<vmem>>, %arg3: memref<256x256xbf16, #tpu.memory_space<vmem>>, %arg4: memref<1x256xf32, #tpu.memory_space<vmem>>, %arg5: memref<256x128xbf16, #tpu.memory_space<vmem>>, %arg6: memref<1x128xf32, #tpu.memory_space<vmem>>, %arg7: memref<8x128xf32, #tpu.memory_space<vmem>>) attributes {dimension_semantics = [#tpu.dimension_semantics<parallel>], iteration_bounds = array<i64: 1>, scalar_prefetch = 0 : i64, scratch_operands = 0 : i64, tpu.core_type = #tpu.core_type<tc>, window_params = [{transform_indices = @transform_0, window_bounds = array<i64: 12>}, {transform_indices = @transform_1, window_bounds = array<i64: 8, 8, 256>}, {pipeline_mode = #tpu.pipeline_mode<synchronous>, transform_indices = @transform_2, window_bounds = array<i64: 256, 256>}, {pipeline_mode = #tpu.pipeline_mode<synchronous>, transform_indices = @transform_3, window_bounds = array<i64: 1, 256>}, {pipeline_mode = #tpu.pipeline_mode<synchronous>, transform_indices = @transform_4, window_bounds = array<i64: 256, 128>}, {pipeline_mode = #tpu.pipeline_mode<synchronous>, transform_indices = @transform_5, window_bounds = array<i64: 1, 128>}, {transform_indices = @transform_6, window_bounds = array<i64: 8, 128>}]} {
    %c0 = arith.constant 0 : index
    %c0_0 = arith.constant 0 : index
    %c0_1 = arith.constant 0 : index
    %0 = vector.load %arg2[%c0, %c0_0, %c0_1] : memref<8x8x256xbf16, #tpu.memory_space<vmem>>, vector<1x8x256xbf16>
    %1 = vector.shape_cast %0 : vector<1x8x256xbf16> to vector<8x256xbf16>
    %2 = arith.extf %1 : vector<8x256xbf16> to vector<8x256xf32>
    %c1 = arith.constant 1 : index
    %c0_2 = arith.constant 0 : index
    %c0_3 = arith.constant 0 : index
    %3 = vector.load %arg2[%c1, %c0_2, %c0_3] : memref<8x8x256xbf16, #tpu.memory_space<vmem>>, vector<1x8x256xbf16>
    %4 = vector.shape_cast %3 : vector<1x8x256xbf16> to vector<8x256xbf16>
    %5 = arith.extf %4 : vector<8x256xbf16> to vector<8x256xf32>
    %c2 = arith.constant 2 : index
    %c0_4 = arith.constant 0 : index
    %c0_5 = arith.constant 0 : index
    %6 = vector.load %arg2[%c2, %c0_4, %c0_5] : memref<8x8x256xbf16, #tpu.memory_space<vmem>>, vector<1x8x256xbf16>
    %7 = vector.shape_cast %6 : vector<1x8x256xbf16> to vector<8x256xbf16>
    %8 = arith.extf %7 : vector<8x256xbf16> to vector<8x256xf32>
    %c3 = arith.constant 3 : index
    %c0_6 = arith.constant 0 : index
    %c0_7 = arith.constant 0 : index
    %9 = vector.load %arg2[%c3, %c0_6, %c0_7] : memref<8x8x256xbf16, #tpu.memory_space<vmem>>, vector<1x8x256xbf16>
    %10 = vector.shape_cast %9 : vector<1x8x256xbf16> to vector<8x256xbf16>
    %11 = arith.extf %10 : vector<8x256xbf16> to vector<8x256xf32>
    %c4 = arith.constant 4 : index
    %c0_8 = arith.constant 0 : index
    %c0_9 = arith.constant 0 : index
    %12 = vector.load %arg2[%c4, %c0_8, %c0_9] : memref<8x8x256xbf16, #tpu.memory_space<vmem>>, vector<1x8x256xbf16>
    %13 = vector.shape_cast %12 : vector<1x8x256xbf16> to vector<8x256xbf16>
    %14 = arith.extf %13 : vector<8x256xbf16> to vector<8x256xf32>
    %c5 = arith.constant 5 : index
    %c0_10 = arith.constant 0 : index
    %c0_11 = arith.constant 0 : index
    %15 = vector.load %arg2[%c5, %c0_10, %c0_11] : memref<8x8x256xbf16, #tpu.memory_space<vmem>>, vector<1x8x256xbf16>
    %16 = vector.shape_cast %15 : vector<1x8x256xbf16> to vector<8x256xbf16>
    %17 = arith.extf %16 : vector<8x256xbf16> to vector<8x256xf32>
    %c6 = arith.constant 6 : index
    %c0_12 = arith.constant 0 : index
    %c0_13 = arith.constant 0 : index
    %18 = vector.load %arg2[%c6, %c0_12, %c0_13] : memref<8x8x256xbf16, #tpu.memory_space<vmem>>, vector<1x8x256xbf16>
    %19 = vector.shape_cast %18 : vector<1x8x256xbf16> to vector<8x256xbf16>
    %20 = arith.extf %19 : vector<8x256xbf16> to vector<8x256xf32>
    %c7 = arith.constant 7 : index
    %c0_14 = arith.constant 0 : index
    %c0_15 = arith.constant 0 : index
    %21 = vector.load %arg2[%c7, %c0_14, %c0_15] : memref<8x8x256xbf16, #tpu.memory_space<vmem>>, vector<1x8x256xbf16>
    %22 = vector.shape_cast %21 : vector<1x8x256xbf16> to vector<8x256xbf16>
    %23 = arith.extf %22 : vector<8x256xbf16> to vector<8x256xf32>
    %c0_16 = arith.constant 0 : index
    %24 = memref.load %arg1[%c0_16] : memref<12xf32, #tpu.memory_space<smem>>
    %c1_17 = arith.constant 1 : index
    %25 = memref.load %arg1[%c1_17] : memref<12xf32, #tpu.memory_space<smem>>
    %c2_18 = arith.constant 2 : index
    %26 = memref.load %arg1[%c2_18] : memref<12xf32, #tpu.memory_space<smem>>
    %c3_19 = arith.constant 3 : index
    %27 = memref.load %arg1[%c3_19] : memref<12xf32, #tpu.memory_space<smem>>
    %28 = vector.broadcast %25 : f32 to vector<8x256xf32>
    %29 = arith.mulf %28, %2 : vector<8x256xf32>
    %30 = vector.broadcast %26 : f32 to vector<8x256xf32>
    %31 = arith.mulf %30, %5 : vector<8x256xf32>
    %32 = arith.addf %29, %31 : vector<8x256xf32>
    %33 = vector.broadcast %27 : f32 to vector<8x256xf32>
    %34 = arith.addf %32, %33 : vector<8x256xf32>
    %cst = arith.constant 0.000000e+00 : f32
    %35 = vector.broadcast %cst : f32 to vector<8x256xf32>
    %36 = arith.maximumf %34, %35 : vector<8x256xf32>
    %37 = vector.broadcast %25 : f32 to vector<8x256xf32>
    %38 = arith.mulf %37, %8 : vector<8x256xf32>
    %39 = vector.broadcast %26 : f32 to vector<8x256xf32>
    %40 = arith.mulf %39, %11 : vector<8x256xf32>
    %41 = arith.addf %38, %40 : vector<8x256xf32>
    %42 = vector.broadcast %27 : f32 to vector<8x256xf32>
    %43 = arith.addf %41, %42 : vector<8x256xf32>
    %44 = vector.broadcast %24 : f32 to vector<8x256xf32>
    %45 = arith.mulf %44, %5 : vector<8x256xf32>
    %46 = arith.addf %43, %45 : vector<8x256xf32>
    %cst_20 = arith.constant 0.000000e+00 : f32
    %47 = vector.broadcast %cst_20 : f32 to vector<8x256xf32>
    %48 = arith.maximumf %46, %47 : vector<8x256xf32>
    %49 = vector.broadcast %25 : f32 to vector<8x256xf32>
    %50 = arith.mulf %49, %14 : vector<8x256xf32>
    %51 = vector.broadcast %26 : f32 to vector<8x256xf32>
    %52 = arith.mulf %51, %17 : vector<8x256xf32>
    %53 = arith.addf %50, %52 : vector<8x256xf32>
    %54 = vector.broadcast %27 : f32 to vector<8x256xf32>
    %55 = arith.addf %53, %54 : vector<8x256xf32>
    %56 = vector.broadcast %24 : f32 to vector<8x256xf32>
    %57 = arith.mulf %56, %11 : vector<8x256xf32>
    %58 = arith.addf %55, %57 : vector<8x256xf32>
    %cst_21 = arith.constant 0.000000e+00 : f32
    %59 = vector.broadcast %cst_21 : f32 to vector<8x256xf32>
    %60 = arith.maximumf %58, %59 : vector<8x256xf32>
    %61 = vector.broadcast %25 : f32 to vector<8x256xf32>
    %62 = arith.mulf %61, %20 : vector<8x256xf32>
    %63 = vector.broadcast %26 : f32 to vector<8x256xf32>
    %64 = arith.mulf %63, %23 : vector<8x256xf32>
    %65 = arith.addf %62, %64 : vector<8x256xf32>
    %66 = vector.broadcast %27 : f32 to vector<8x256xf32>
    %67 = arith.addf %65, %66 : vector<8x256xf32>
    %68 = vector.broadcast %24 : f32 to vector<8x256xf32>
    %69 = arith.mulf %68, %17 : vector<8x256xf32>
    %70 = arith.addf %67, %69 : vector<8x256xf32>
    %cst_22 = arith.constant 0.000000e+00 : f32
    %71 = vector.broadcast %cst_22 : f32 to vector<8x256xf32>
    %72 = arith.maximumf %70, %71 : vector<8x256xf32>
    %c4_23 = arith.constant 4 : index
    %73 = memref.load %arg1[%c4_23] : memref<12xf32, #tpu.memory_space<smem>>
    %c5_24 = arith.constant 5 : index
    %74 = memref.load %arg1[%c5_24] : memref<12xf32, #tpu.memory_space<smem>>
    %c6_25 = arith.constant 6 : index
    %75 = memref.load %arg1[%c6_25] : memref<12xf32, #tpu.memory_space<smem>>
    %c7_26 = arith.constant 7 : index
    %76 = memref.load %arg1[%c7_26] : memref<12xf32, #tpu.memory_space<smem>>
    %77 = vector.broadcast %74 : f32 to vector<8x256xf32>
    %78 = arith.mulf %77, %36 : vector<8x256xf32>
    %79 = vector.broadcast %75 : f32 to vector<8x256xf32>
    %80 = arith.mulf %79, %48 : vector<8x256xf32>
    %81 = arith.addf %78, %80 : vector<8x256xf32>
    %82 = vector.broadcast %76 : f32 to vector<8x256xf32>
    %83 = arith.addf %81, %82 : vector<8x256xf32>
    %cst_27 = arith.constant 0.000000e+00 : f32
    %84 = vector.broadcast %cst_27 : f32 to vector<8x256xf32>
    %85 = arith.maximumf %83, %84 : vector<8x256xf32>
    %86 = vector.broadcast %74 : f32 to vector<8x256xf32>
    %87 = arith.mulf %86, %60 : vector<8x256xf32>
    %88 = vector.broadcast %75 : f32 to vector<8x256xf32>
    %89 = arith.mulf %88, %72 : vector<8x256xf32>
    %90 = arith.addf %87, %89 : vector<8x256xf32>
    %91 = vector.broadcast %76 : f32 to vector<8x256xf32>
    %92 = arith.addf %90, %91 : vector<8x256xf32>
    %93 = vector.broadcast %73 : f32 to vector<8x256xf32>
    %94 = arith.mulf %93, %48 : vector<8x256xf32>
    %95 = arith.addf %92, %94 : vector<8x256xf32>
    %cst_28 = arith.constant 0.000000e+00 : f32
    %96 = vector.broadcast %cst_28 : f32 to vector<8x256xf32>
    %97 = arith.maximumf %95, %96 : vector<8x256xf32>
    %c9 = arith.constant 9 : index
    %98 = memref.load %arg1[%c9] : memref<12xf32, #tpu.memory_space<smem>>
    %c10 = arith.constant 10 : index
    %99 = memref.load %arg1[%c10] : memref<12xf32, #tpu.memory_space<smem>>
    %c11 = arith.constant 11 : index
    %100 = memref.load %arg1[%c11] : memref<12xf32, #tpu.memory_space<smem>>
    %101 = vector.broadcast %98 : f32 to vector<8x256xf32>
    %102 = arith.mulf %101, %85 : vector<8x256xf32>
    %103 = vector.broadcast %99 : f32 to vector<8x256xf32>
    %104 = arith.mulf %103, %97 : vector<8x256xf32>
    %105 = arith.addf %102, %104 : vector<8x256xf32>
    %106 = vector.broadcast %100 : f32 to vector<8x256xf32>
    %107 = arith.addf %105, %106 : vector<8x256xf32>
    %cst_29 = arith.constant 0.000000e+00 : f32
    %108 = vector.broadcast %cst_29 : f32 to vector<8x256xf32>
    %109 = arith.maximumf %107, %108 : vector<8x256xf32>
    %110 = arith.truncf %109 : vector<8x256xf32> to vector<8x256xbf16>
    %c0_30 = arith.constant 0 : index
    %c0_31 = arith.constant 0 : index
    %111 = vector.load %arg3[%c0_30, %c0_31] : memref<256x256xbf16, #tpu.memory_space<vmem>>, vector<256x256xbf16>
    %cst_32 = arith.constant dense<0.000000e+00> : vector<8x256xf32>
    %112 = tpu.matmul %110, %111, %cst_32 {dimension_numbers = #tpu.dot_dimension_numbers<[1], [0], [0], [1], [0, 0, 1, 1], [], []>} : vector<8x256xbf16>, vector<256x256xbf16>, vector<8x256xf32> -> vector<8x256xf32>
    %c0_33 = arith.constant 0 : index
    %c0_34 = arith.constant 0 : index
    %113 = vector.load %arg4[%c0_33, %c0_34] : memref<1x256xf32, #tpu.memory_space<vmem>>, vector<1x256xf32>
    %114 = vector.broadcast %113 : vector<1x256xf32> to vector<8x256xf32>
    %115 = arith.addf %112, %114 : vector<8x256xf32>
    %cst_35 = arith.constant 0.000000e+00 : f32
    %116 = vector.broadcast %cst_35 : f32 to vector<8x256xf32>
    %117 = arith.maximumf %115, %116 : vector<8x256xf32>
    %118 = arith.truncf %117 : vector<8x256xf32> to vector<8x256xbf16>
    %c0_36 = arith.constant 0 : index
    %c0_37 = arith.constant 0 : index
    %119 = vector.load %arg5[%c0_36, %c0_37] : memref<256x128xbf16, #tpu.memory_space<vmem>>, vector<256x128xbf16>
    %cst_38 = arith.constant dense<0.000000e+00> : vector<8x128xf32>
    %120 = tpu.matmul %118, %119, %cst_38 {dimension_numbers = #tpu.dot_dimension_numbers<[1], [0], [0], [1], [0, 0, 1, 1], [], []>} : vector<8x256xbf16>, vector<256x128xbf16>, vector<8x128xf32> -> vector<8x128xf32>
    %c0_39 = arith.constant 0 : index
    %c0_40 = arith.constant 0 : index
    %121 = vector.load %arg6[%c0_39, %c0_40] : memref<1x128xf32, #tpu.memory_space<vmem>>, vector<1x128xf32>
    %122 = vector.broadcast %121 : vector<1x128xf32> to vector<8x128xf32>
    %123 = arith.addf %120, %122 : vector<8x128xf32>
    %c0_41 = arith.constant 0 : index
    %c0_42 = arith.constant 0 : index
    %124 = vector.load %arg7[%c0_41, %c0_42] : memref<8x128xf32, #tpu.memory_space<vmem>>, vector<8x128xf32>
    tpu.vector_store %arg7[%c0_41, %c0_42], %123 {strides = array<i32>} : memref<8x128xf32, #tpu.memory_space<vmem>>, vector<8x128xf32>,
    return
  }
  func.func @transform_0(%arg0: i32) -> i32 {
    %c0_i32 = arith.constant 0 : i32
    %c0_i32_0 = arith.constant 0 : i32
    return %c0_i32 : i32
  }
  func.func @transform_1(%arg0: i32) -> (i32, i32, i32) {
    %c0_i32 = arith.constant 0 : i32
    %c0_i32_0 = arith.constant 0 : i32
    %c0_i32_1 = arith.constant 0 : i32
    return %c0_i32, %arg0, %c0_i32_0 : i32, i32, i32
  }
  func.func @transform_2(%arg0: i32) -> (i32, i32) {
    %c0_i32 = arith.constant 0 : i32
    %c0_i32_0 = arith.constant 0 : i32
    %c0_i32_1 = arith.constant 0 : i32
    return %c0_i32, %c0_i32_0 : i32, i32
  }
  func.func @transform_3(%arg0: i32) -> (i32, i32) {
    %c0_i32 = arith.constant 0 : i32
    %c0_i32_0 = arith.constant 0 : i32
    %c0_i32_1 = arith.constant 0 : i32
    return %c0_i32, %c0_i32_0 : i32, i32
  }
  func.func @transform_4(%arg0: i32) -> (i32, i32) {
    %c0_i32 = arith.constant 0 : i32
    %c0_i32_0 = arith.constant 0 : i32
    %c0_i32_1 = arith.constant 0 : i32
    return %c0_i32, %c0_i32_0 : i32, i32
  }
  func.func @transform_5(%arg0: i32) -> (i32, i32) {
    %c0_i32 = arith.constant 0 : i32
    %c0_i32_0 = arith.constant 0 : i32
    %c0_i32_1 = arith.constant 0 : i32
    return %c0_i32, %c0_i32_0 : i32, i32
  }
  func.func @transform_6(%arg0: i32) -> (i32, i32) {
    %c0_i32 = arith.constant 0 : i32
    %c0_i32_0 = arith.constant 0 : i32
    return %arg0, %c0_i32 : i32, i32
  }
}

</mosaic_0001>

<llo_original>
// kernel: _lambda_.1
$region0: #{_lambda_.1}
  #allocation0 [shape = 'u32[]', space=smem, size = 0x4, offset = 0x4, fixed_abs, tag = 'smem constant byte address 0x4 - core index']
  #allocation1 [shape = 'u32[144,128]{1,0:T(1,128)}', space=vmem, size = 0x12000, scoped, tag = 'internal scratch']
  %s0 = inlined_call_operand.vmem [shape: f32[12], index: 0, kind: input, shape index: {}]
  %s1 = inlined_call_operand.vmem [shape: bf16[8,8,256], index: 1, kind: input, shape index: {}]
  %s2 = inlined_call_operand.vmem [shape: bf16[256,256], index: 2, kind: input, shape index: {}]
  %s3 = inlined_call_operand.vmem [shape: f32[1,256], index: 3, kind: input, shape index: {}]
  %s4 = inlined_call_operand.vmem [shape: bf16[256,128], index: 4, kind: input, shape index: {}]
  %s5 = inlined_call_operand.vmem [shape: f32[1,128], index: 5, kind: input, shape index: {}]
  %s6 = inlined_call_operand.vmem [shape: f32[8,128], index: 6, kind: output, shape index: {}]
  %s7 = sld [smem:[#allocation0]]
  $region38: #{_lambda_.1} parent=0
    _
  %s9 = ssub.s32 1, %s7
  %s10 = scalar_select 0, %s9, %s7
  $region1: #{_lambda_.1} parent=0
    #allocation2 [shape = 'u8[512]{0}', space=smem, size = 0x200, scoped, tag = 'input window, operand 0, single buffered']
    #allocation3 [shape = 's32[1]{0}', space=sflag, size = 0x4, scoped, tag = 'scoped memory for _lambda_.1']
    %11 = vsyncpa [#allocation3], 0
    // Predicated region
    $region2: #{_lambda_.1} parent=1 // pred_check
      _
    $region3: #{_lambda_.1} parent=1 // pred_check_branch
      %13 = sbr.rel (0) target = $region5
    $region4: #{_lambda_.1} parent=1 // pred_region
      %s15 = ssub.s32 16, 16
      %16 = vsyncadd [#allocation3], %s15
      %s18 = sshll.u32 %s0, 4
      %s19 = int_to_ptr.vmem [resolvable:$true] %s18
      %21 = dma.vmem_to_smem %s19, 16, [#allocation2], [#allocation3]
    $region5: #{_lambda_.1} parent=1 // pred_fallthru
      _
    // Predicated region
    $region6: #{_lambda_.1} parent=1 // pred_check
      _
    $region7: #{_lambda_.1} parent=1 // pred_check_branch
      %23 = sbr.rel (0) target = $region9
    $region8: #{_lambda_.1} parent=1 // pred_region
      _
    $region9: #{_lambda_.1} parent=1 // pred_fallthru
      _
    // Predicated region
    $region10: #{_lambda_.1} parent=1 // pred_check
      _
    $region11: #{_lambda_.1} parent=1 // pred_check_branch
      %25 = sbr.rel (0) target = $region13
    $region12: #{_lambda_.1} parent=1 // pred_region
      _
    $region13: #{_lambda_.1} parent=1 // pred_fallthru
      _
    // Predicated region
    $region14: #{_lambda_.1} parent=1 // pred_check
      _
    $region15: #{_lambda_.1} parent=1 // pred_check_branch
      %27 = sbr.rel (0) target = $region17
    $region16: #{_lambda_.1} parent=1 // pred_region
      _
    $region17: #{_lambda_.1} parent=1 // pred_fallthru
      _
    // Predicated region
    $region18: #{_lambda_.1} parent=1 // pred_check
      _
    $region19: #{_lambda_.1} parent=1 // pred_check_branch
      %29 = sbr.rel (0) target = $region21
    $region20: #{_lambda_.1} parent=1 // pred_region
      _
    $region21: #{_lambda_.1} parent=1 // pred_fallthru
      _
    // Predicated region
    $region22: #{_lambda_.1} parent=1 // pred_check
      _
    $region23: #{_lambda_.1} parent=1 // pred_check_branch
      %31 = sbr.rel (0) target = $region25
    $region24: #{_lambda_.1} parent=1 // pred_region
      _
    $region25: #{_lambda_.1} parent=1 // pred_fallthru
      _
    // Predicated region
    $region26: #{_lambda_.1} parent=1 // pred_check
      _
    $region27: #{_lambda_.1} parent=1 // pred_check_branch
      %33 = sbr.rel (0) target = $region29
    $region28: #{_lambda_.1} parent=1 // pred_region
      %34 = dma.done [#allocation3], 16
    $region29: #{_lambda_.1} parent=1 // pred_fallthru
      _
    %35 = sfence
    %v37 = vld [vmem:[%s1] sm:$0xff]
    %v38 = vunpack.c.l.bf16 %v37
    %v39 = vunpack.c.h.bf16 %v37
    %s40 = scalar_lea.vmem %s1, 8
    %v41 = vld [vmem:[%s40] sm:$0xff]
    %v42 = vunpack.c.l.bf16 %v41
    %v43 = vunpack.c.h.bf16 %v41
    %s44 = scalar_lea.vmem %s1, 16
    %v45 = vld [vmem:[%s44] sm:$0xff]
    %v46 = vunpack.c.l.bf16 %v45
    %v47 = vunpack.c.h.bf16 %v45
    %s48 = scalar_lea.vmem %s1, 24
    %v49 = vld [vmem:[%s48] sm:$0xff]
    %v50 = vunpack.c.l.bf16 %v49
    %v51 = vunpack.c.h.bf16 %v49
    %s52 = scalar_lea.vmem %s1, 32
    %v53 = vld [vmem:[%s52] sm:$0xff]
    %v54 = vunpack.c.l.bf16 %v53
    %v55 = vunpack.c.h.bf16 %v53
    %s56 = scalar_lea.vmem %s1, 40
    %v57 = vld [vmem:[%s56] sm:$0xff]
    %v58 = vunpack.c.l.bf16 %v57
    %v59 = vunpack.c.h.bf16 %v57
    %s60 = scalar_lea.vmem %s1, 48
    %v61 = vld [vmem:[%s60] sm:$0xff]
    %v62 = vunpack.c.l.bf16 %v61
    %v63 = vunpack.c.h.bf16 %v61
    %s64 = scalar_lea.vmem %s1, 56
    %v65 = vld [vmem:[%s64] sm:$0xff]
    %v66 = vunpack.c.l.bf16 %v65
    %v67 = vunpack.c.h.bf16 %v65
    %s68 = sld [smem:[#allocation2]]
    %s69 = sld [smem:[#allocation2 + $0x1]]
    %s70 = sld [smem:[#allocation2 + $0x2]]
    %s71 = sld [smem:[#allocation2 + $0x3]]
    %v72 = vstv %s69
    %v73 = vmul.f32 %v72, %v38
    %v74 = vmul.f32 %v72, %v39
    %v75 = vstv %s70
    %v76 = vmul.f32 %v75, %v42
    %v77 = vmul.f32 %v75, %v43
    %v78 = vadd.f32 %v73, %v76
    %v79 = vadd.f32 %v74, %v77
    %v80 = vstv %s71
    %v81 = vadd.f32 %v78, %v80
    %v82 = vadd.f32 %v79, %v80
    %v83 = vmax.f32 %v81, 0.0
    %v84 = vmax.f32 %v82, 0.0
    %v85 = vmul.f32 %v72, %v46
    %v86 = vmul.f32 %v72, %v47
    %v87 = vmul.f32 %v75, %v50
    %v88 = vmul.f32 %v75, %v51
    %v89 = vadd.f32 %v85, %v87
    %v90 = vadd.f32 %v86, %v88
    %v91 = vadd.f32 %v89, %v80
    %v92 = vadd.f32 %v90, %v80
    %v93 = vstv %s68
    %v94 = vmul.f32 %v93, %v42
    %v95 = vmul.f32 %v93, %v43
    %v96 = vadd.f32 %v91, %v94
    %v97 = vadd.f32 %v92, %v95
    %v98 = vmax.f32 %v96, 0.0
    %v99 = vmax.f32 %v97, 0.0
    %v100 = vmul.f32 %v72, %v54
    %v101 = vmul.f32 %v72, %v55
    %v102 = vmul.f32 %v75, %v58
    %v103 = vmul.f32 %v75, %v59
    %v104 = vadd.f32 %v100, %v102
    %v105 = vadd.f32 %v101, %v103
    %v106 = vadd.f32 %v104, %v80
    %v107 = vadd.f32 %v105, %v80
    %v108 = vmul.f32 %v93, %v50
    %v109 = vmul.f32 %v93, %v51
    %v110 = vadd.f32 %v106, %v108
    %v111 = vadd.f32 %v107, %v109
    %v112 = vmax.f32 %v110, 0.0
    %v113 = vmax.f32 %v111, 0.0
    %v114 = vmul.f32 %v72, %v62
    %v115 = vmul.f32 %v72, %v63
    %v116 = vmul.f32 %v75, %v66
    %v117 = vmul.f32 %v75, %v67
    %v118 = vadd.f32 %v114, %v116
    %v119 = vadd.f32 %v115, %v117
    %v120 = vadd.f32 %v118, %v80
    %v121 = vadd.f32 %v119, %v80
    %v122 = vmul.f32 %v93, %v58
    %v123 = vmul.f32 %v93, %v59
    %v124 = vadd.f32 %v120, %v122
    %v125 = vadd.f32 %v121, %v123
    %v126 = vmax.f32 %v124, 0.0
    %v127 = vmax.f32 %v125, 0.0
    %s128 = sld [smem:[#allocation2 + $0x4]]
    %s129 = sld [smem:[#allocation2 + $0x5]]
    %s130 = sld [smem:[#allocation2 + $0x6]]
    %s131 = sld [smem:[#allocation2 + $0x7]]
    %v132 = vstv %s129
    %v133 = vmul.f32 %v132, %v83
    %v134 = vmul.f32 %v132, %v84
    %v135 = vstv %s130
    %v136 = vmul.f32 %v135, %v98
    %v137 = vmul.f32 %v135, %v99
    %v138 = vadd.f32 %v133, %v136
    %v139 = vadd.f32 %v134, %v137
    %v140 = vstv %s131
    %v141 = vadd.f32 %v138, %v140
    %v142 = vadd.f32 %v139, %v140
    %v143 = vmax.f32 %v141, 0.0
    %v144 = vmax.f32 %v142, 0.0
    %v145 = vmul.f32 %v132, %v112
    %v146 = vmul.f32 %v132, %v113
    %v147 = vmul.f32 %v135, %v126
    %v148 = vmul.f32 %v135, %v127
    %v149 = vadd.f32 %v145, %v147
    %v150 = vadd.f32 %v146, %v148
    %v151 = vadd.f32 %v149, %v140
    %v152 = vadd.f32 %v150, %v140
    %v153 = vstv %s128
    %v154 = vmul.f32 %v153, %v98
    %v155 = vmul.f32 %v153, %v99
    %v156 = vadd.f32 %v151, %v154
    %v157 = vadd.f32 %v152, %v155
    %v158 = vmax.f32 %v156, 0.0
    %v159 = vmax.f32 %v157, 0.0
    %s160 = sld [smem:[#allocation2 + $0x9]]
    %s161 = sld [smem:[#allocation2 + $0xa]]
    %s162 = sld [smem:[#allocation2 + $0xb]]
    %v163 = vstv %s160
    %v164 = vmul.f32 %v163, %v143
    %v165 = vmul.f32 %v163, %v144
    %v166 = vstv %s161
    %v167 = vmul.f32 %v166, %v158
    %v168 = vmul.f32 %v166, %v159
    %v169 = vadd.f32 %v164, %v167
    %v170 = vadd.f32 %v165, %v168
    %v171 = vstv %s162
    %v172 = vadd.f32 %v169, %v171
    %v173 = vadd.f32 %v170, %v171
    %v174 = vmax.f32 %v172, 0.0
    %v175 = vmax.f32 %v173, 0.0
    %v176 = vpack.c.bf16 %v174, %v174
    %v177 = vpack.c.bf16 %v175, %v175
    %v178 = vld [vmem:[%s2] sm:$0xff]
    %v179 = vld [vmem:[%s2 + $0x8] sm:$0xff]
    %v180 = vld [vmem:[%s2 + $0x10] sm:$0xff]
    %v181 = vld [vmem:[%s2 + $0x18] sm:$0xff]
    %v182 = vld [vmem:[%s2 + $0x20] sm:$0xff]
    %v183 = vld [vmem:[%s2 + $0x28] sm:$0xff]
    %v184 = vld [vmem:[%s2 + $0x30] sm:$0xff]
    %v185 = vld [vmem:[%s2 + $0x38] sm:$0xff]
    %v186 = vld [vmem:[%s2 + $0x40] sm:$0xff]
    %v187 = vld [vmem:[%s2 + $0x48] sm:$0xff]
    %v188 = vld [vmem:[%s2 + $0x50] sm:$0xff]
    %v189 = vld [vmem:[%s2 + $0x58] sm:$0xff]
    %v190 = vld [vmem:[%s2 + $0x60] sm:$0xff]
    %v191 = vld [vmem:[%s2 + $0x68] sm:$0xff]
    %v192 = vld [vmem:[%s2 + $0x70] sm:$0xff]
    %v193 = vld [vmem:[%s2 + $0x78] sm:$0xff]
    %v194 = vld [vmem:[%s2 + $0x80] sm:$0xff]
    %v195 = vld [vmem:[%s2 + $0x88] sm:$0xff]
    %v196 = vld [vmem:[%s2 + $0x90] sm:$0xff]
    %v197 = vld [vmem:[%s2 + $0x98] sm:$0xff]
    %v198 = vld [vmem:[%s2 + $0xa0] sm:$0xff]
    %v199 = vld [vmem:[%s2 + $0xa8] sm:$0xff]
    %v200 = vld [vmem:[%s2 + $0xb0] sm:$0xff]
    %v201 = vld [vmem:[%s2 + $0xb8] sm:$0xff]
    %v202 = vld [vmem:[%s2 + $0xc0] sm:$0xff]
    %v203 = vld [vmem:[%s2 + $0xc8] sm:$0xff]
    %v204 = vld [vmem:[%s2 + $0xd0] sm:$0xff]
    %v205 = vld [vmem:[%s2 + $0xd8] sm:$0xff]
    %v206 = vld [vmem:[%s2 + $0xe0] sm:$0xff]
    %v207 = vld [vmem:[%s2 + $0xe8] sm:$0xff]
    %v208 = vld [vmem:[%s2 + $0xf0] sm:$0xff]
    %v209 = vld [vmem:[%s2 + $0xf8] sm:$0xff]
    %v210 = vld [vmem:[%s3] sm:$0x3]
    %v212 = vlaneseq
    %v213 = vshrl.u32 %v212, 7
    %v214 = vsub.s32 0, %v213
    %v215 = vrot.slane %v210, %v214
    %v216 = vlaneseq
    %v217 = vshrl.u32 %v216, 7
    %v218 = vsub.s32 1, %v217
    %v219 = vrot.slane %v210, %v218
    %v254 = vunpack.c.l.b16 %v178
    %v255 = vunpack.c.h.b16 %v178
    %v256 = vunpack.c.l.b16 %v179
    %v257 = vunpack.c.h.b16 %v179
    %v258 = vunpack.c.l.b16 %v180
    %v259 = vunpack.c.h.b16 %v180
    %v260 = vunpack.c.l.b16 %v181
    %v261 = vunpack.c.h.b16 %v181
    %v262 = vunpack.c.l.b16 %v182
    %v263 = vunpack.c.h.b16 %v182
    %v264 = vunpack.c.l.b16 %v183
    %v265 = vunpack.c.h.b16 %v183
    %v266 = vunpack.c.l.b16 %v184
    %v267 = vunpack.c.h.b16 %v184
    %v268 = vunpack.c.l.b16 %v185
    %v269 = vunpack.c.h.b16 %v185
    %v270 = vunpack.c.l.b16 %v186
    %v271 = vunpack.c.h.b16 %v186
    %v272 = vunpack.c.l.b16 %v187
    %v273 = vunpack.c.h.b16 %v187
    %v274 = vunpack.c.l.b16 %v188
    %v275 = vunpack.c.h.b16 %v188
    %v276 = vunpack.c.l.b16 %v189
    %v277 = vunpack.c.h.b16 %v189
    %v278 = vunpack.c.l.b16 %v190
    %v279 = vunpack.c.h.b16 %v190
    %v280 = vunpack.c.l.b16 %v191
    %v281 = vunpack.c.h.b16 %v191
    %v282 = vunpack.c.l.b16 %v192
    %v283 = vunpack.c.h.b16 %v192
    %v284 = vunpack.c.l.b16 %v193
    %v285 = vunpack.c.h.b16 %v193
    %v286 = vunpack.c.l.b16 %v194
    %v287 = vunpack.c.h.b16 %v194
    %v288 = vunpack.c.l.b16 %v195
    %v289 = vunpack.c.h.b16 %v195
    %v290 = vunpack.c.l.b16 %v196
    %v291 = vunpack.c.h.b16 %v196
    %v292 = vunpack.c.l.b16 %v197
    %v293 = vunpack.c.h.b16 %v197
    %v294 = vunpack.c.l.b16 %v198
    %v295 = vunpack.c.h.b16 %v198
    %v296 = vunpack.c.l.b16 %v199
    %v297 = vunpack.c.h.b16 %v199
    %v298 = vunpack.c.l.b16 %v200
    %v299 = vunpack.c.h.b16 %v200
    %v300 = vunpack.c.l.b16 %v201
    %v301 = vunpack.c.h.b16 %v201
    %v302 = vunpack.c.l.b16 %v202
    %v303 = vunpack.c.h.b16 %v202
    %v304 = vunpack.c.l.b16 %v203
    %v305 = vunpack.c.h.b16 %v203
    %v306 = vunpack.c.l.b16 %v204
    %v307 = vunpack.c.h.b16 %v204
    %v308 = vunpack.c.l.b16 %v205
    %v309 = vunpack.c.h.b16 %v205
    %v310 = vunpack.c.l.b16 %v206
    %v311 = vunpack.c.h.b16 %v206
    %v312 = vunpack.c.l.b16 %v207
    %v313 = vunpack.c.h.b16 %v207
    %v314 = vunpack.c.l.b16 %v208
    %v315 = vunpack.c.h.b16 %v208
    %v316 = vunpack.c.l.b16 %v209
    %v317 = vunpack.c.h.b16 %v209
    %v318 = vpack.c.b16 %v256, %v254
    %v319 = vpack.c.b16 %v257, %v255
    %v320 = vpack.c.b16 %v260, %v258
    %v321 = vpack.c.b16 %v261, %v259
    %v322 = vpack.c.b16 %v264, %v262
    %v323 = vpack.c.b16 %v265, %v263
    %v324 = vpack.c.b16 %v268, %v266
    %v325 = vpack.c.b16 %v269, %v267
    %v326 = vpack.c.b16 %v272, %v270
    %v327 = vpack.c.b16 %v273, %v271
    %v328 = vpack.c.b16 %v276, %v274
    %v329 = vpack.c.b16 %v277, %v275
    %v330 = vpack.c.b16 %v280, %v278
    %v331 = vpack.c.b16 %v281, %v279
    %v332 = vpack.c.b16 %v284, %v282
    %v333 = vpack.c.b16 %v285, %v283
    %v334 = vpack.c.b16 %v288, %v286
    %v335 = vpack.c.b16 %v289, %v287
    %v336 = vpack.c.b16 %v292, %v290
    %v337 = vpack.c.b16 %v293, %v291
    %v338 = vpack.c.b16 %v296, %v294
    %v339 = vpack.c.b16 %v297, %v295
    %v340 = vpack.c.b16 %v300, %v298
    %v341 = vpack.c.b16 %v301, %v299
    %v342 = vpack.c.b16 %v304, %v302
    %v343 = vpack.c.b16 %v305, %v303
    %v344 = vpack.c.b16 %v308, %v306
    %v345 = vpack.c.b16 %v309, %v307
    %v346 = vpack.c.b16 %v312, %v310
    %v347 = vpack.c.b16 %v313, %v311
    %v348 = vpack.c.b16 %v316, %v314
    %v349 = vpack.c.b16 %v317, %v315
    %382 = vmatprep.subr.bf16.mxu0 %v333
    %383 = vmatpush1.bf16.msra.mxu0 %v332
    %384 = vmatprep.subr.bf16.mxu0 %v331
    %385 = vmatpush1.bf16.msra.mxu0 %v330
    %386 = vmatprep.subr.bf16.mxu0 %v329
    %387 = vmatpush1.bf16.msra.mxu0 %v328
    %388 = vmatprep.subr.bf16.mxu0 %v327
    %389 = vmatpush1.bf16.msra.mxu0 %v326
    %390 = vmatprep.subr.bf16.mxu0 %v325
    %391 = vmatpush1.bf16.msra.mxu0 %v324
    %392 = vmatprep.subr.bf16.mxu0 %v323
    %393 = vmatpush1.bf16.msra.mxu0 %v322
    %394 = vmatprep.subr.bf16.mxu0 %v321
    %395 = vmatpush1.bf16.msra.mxu0 %v320
    %396 = vmatprep.subr.bf16.mxu0 %v319
    %397 = vmatpush1.bf16.msra.mxu0 %v318
    %398 = vmatprep.subr.bf16.mxu0 %v349
    %399 = vmatpush2.bf16.msra.mxu0 %v348
    %400 = vmatprep.subr.bf16.mxu0 %v347
    %401 = vmatpush2.bf16.msra.mxu0 %v346
    %402 = vmatprep.subr.bf16.mxu0 %v345
    %403 = vmatpush2.bf16.msra.mxu0 %v344
    %404 = vmatprep.subr.bf16.mxu0 %v343
    %405 = vmatpush2.bf16.msra.mxu0 %v342
    %406 = vmatprep.subr.bf16.mxu0 %v341
    %407 = vmatpush2.bf16.msra.mxu0 %v340
    %408 = vmatprep.subr.bf16.mxu0 %v339
    %409 = vmatpush2.bf16.msra.mxu0 %v338
    %410 = vmatprep.subr.bf16.mxu0 %v337
    %411 = vmatpush2.bf16.msra.mxu0 %v336
    %412 = vmatprep.subr.bf16.mxu0 %v335
    %413 = vmatpush2.bf16.msra.mxu0 %v334
    %414 = vmatprep.mubr.bf16.mxu0 %v177
    %415 = vmatmul.mubr.bf16.gmra.mxu0 %v176
    %v416 = vpop.f32.mrf.mxu0
    %v417 = vadd.f32 %v215, %v416
    %v418 = vpop.f32.mrf.mxu0
    %v419 = vadd.f32 %v219, %v418
    %v420 = vpop.f32.mrf.mxu0
    %v421 = vpop.f32.mrf.mxu0
    %422 = vdwg.mxu0
    %v423 = vmax.f32 %v417, 0.0
    %v424 = vmax.f32 %v419, 0.0
    %v425 = vpack.c.bf16 %v423, %v423
    %v426 = vpack.c.bf16 %v424, %v424
    %v427 = vld [vmem:[%s4] sm:$0xf]
    %v428 = vld [vmem:[%s4 + $0x4] sm:$0xf]
    %v429 = vld [vmem:[%s4 + $0x8] sm:$0xf]
    %v430 = vld [vmem:[%s4 + $0xc] sm:$0xf]
    %v431 = vld [vmem:[%s4 + $0x10] sm:$0xf]
    %v432 = vld [vmem:[%s4 + $0x14] sm:$0xf]
    %v433 = vld [vmem:[%s4 + $0x18] sm:$0xf]
    %v434 = vld [vmem:[%s4 + $0x1c] sm:$0xf]
    %v435 = vld [vmem:[%s4 + $0x20] sm:$0xf]
    %v436 = vld [vmem:[%s4 + $0x24] sm:$0xf]
    %v437 = vld [vmem:[%s4 + $0x28] sm:$0xf]
    %v438 = vld [vmem:[%s4 + $0x2c] sm:$0xf]
    %v439 = vld [vmem:[%s4 + $0x30] sm:$0xf]
    %v440 = vld [vmem:[%s4 + $0x34] sm:$0xf]
    %v441 = vld [vmem:[%s4 + $0x38] sm:$0xf]
    %v442 = vld [vmem:[%s4 + $0x3c] sm:$0xf]
    %v443 = vld [vmem:[%s4 + $0x40] sm:$0xf]
    %v444 = vld [vmem:[%s4 + $0x44] sm:$0xf]
    %v445 = vld [vmem:[%s4 + $0x48] sm:$0xf]
    %v446 = vld [vmem:[%s4 + $0x4c] sm:$0xf]
    %v447 = vld [vmem:[%s4 + $0x50] sm:$0xf]
    %v448 = vld [vmem:[%s4 + $0x54] sm:$0xf]
    %v449 = vld [vmem:[%s4 + $0x58] sm:$0xf]
    %v450 = vld [vmem:[%s4 + $0x5c] sm:$0xf]
    %v451 = vld [vmem:[%s4 + $0x60] sm:$0xf]
    %v452 = vld [vmem:[%s4 + $0x64] sm:$0xf]
    %v453 = vld [vmem:[%s4 + $0x68] sm:$0xf]
    %v454 = vld [vmem:[%s4 + $0x6c] sm:$0xf]
    %v455 = vld [vmem:[%s4 + $0x70] sm:$0xf]
    %v456 = vld [vmem:[%s4 + $0x74] sm:$0xf]
    %v457 = vld [vmem:[%s4 + $0x78] sm:$0xf]
    %v458 = vld [vmem:[%s4 + $0x7c] sm:$0xf]
    %v459 = vld [vmem:[%s5] sm:$0x1]
    %v461 = vlaneseq
    %v462 = vshrl.u32 %v461, 7
    %v463 = vsub.s32 0, %v462
    %v464 = vrot.slane %v459, %v463
    %v498 = vunpack.c.l.b16 %v427
    %v499 = vunpack.c.l.b16 %v428
    %v500 = vunpack.c.l.b16 %v429
    %v501 = vunpack.c.l.b16 %v430
    %v502 = vunpack.c.l.b16 %v431
    %v503 = vunpack.c.l.b16 %v432
    %v504 = vunpack.c.l.b16 %v433
    %v505 = vunpack.c.l.b16 %v434
    %v506 = vunpack.c.l.b16 %v435
    %v507 = vunpack.c.l.b16 %v436
    %v508 = vunpack.c.l.b16 %v437
    %v509 = vunpack.c.l.b16 %v438
    %v510 = vunpack.c.l.b16 %v439
    %v511 = vunpack.c.l.b16 %v440
    %v512 = vunpack.c.l.b16 %v441
    %v513 = vunpack.c.l.b16 %v442
    %v514 = vunpack.c.l.b16 %v443
    %v515 = vunpack.c.l.b16 %v444
    %v516 = vunpack.c.l.b16 %v445
    %v517 = vunpack.c.l.b16 %v446
    %v518 = vunpack.c.l.b16 %v447
    %v519 = vunpack.c.l.b16 %v448
    %v520 = vunpack.c.l.b16 %v449
    %v521 = vunpack.c.l.b16 %v450
    %v522 = vunpack.c.l.b16 %v451
    %v523 = vunpack.c.l.b16 %v452
    %v524 = vunpack.c.l.b16 %v453
    %v525 = vunpack.c.l.b16 %v454
    %v526 = vunpack.c.l.b16 %v455
    %v527 = vunpack.c.l.b16 %v456
    %v528 = vunpack.c.l.b16 %v457
    %v529 = vunpack.c.l.b16 %v458
    %v530 = vpack.c.b16 %v499, %v498
    %v531 = vpack.c.b16 %v501, %v500
    %v532 = vpack.c.b16 %v503, %v502
    %v533 = vpack.c.b16 %v505, %v504
    %v534 = vpack.c.b16 %v507, %v506
    %v535 = vpack.c.b16 %v509, %v508
    %v536 = vpack.c.b16 %v511, %v510
    %v537 = vpack.c.b16 %v513, %v512
    %v538 = vpack.c.b16 %v515, %v514
    %v539 = vpack.c.b16 %v517, %v516
    %v540 = vpack.c.b16 %v519, %v518
    %v541 = vpack.c.b16 %v521, %v520
    %v542 = vpack.c.b16 %v523, %v522
    %v543 = vpack.c.b16 %v525, %v524
    %v544 = vpack.c.b16 %v527, %v526
    %v545 = vpack.c.b16 %v529, %v528
    %562 = vmatprep.subr.bf16.mxu0 0
    %563 = vmatpush1.bf16.msra.mxu0 %v537
    %564 = vmatprep.subr.bf16.mxu0 0
    %565 = vmatpush1.bf16.msra.mxu0 %v536
    %566 = vmatprep.subr.bf16.mxu0 0
    %567 = vmatpush1.bf16.msra.mxu0 %v535
    %568 = vmatprep.subr.bf16.mxu0 0
    %569 = vmatpush1.bf16.msra.mxu0 %v534
    %570 = vmatprep.subr.bf16.mxu0 0
    %571 = vmatpush1.bf16.msra.mxu0 %v533
    %572 = vmatprep.subr.bf16.mxu0 0
    %573 = vmatpush1.bf16.msra.mxu0 %v532
    %574 = vmatprep.subr.bf16.mxu0 0
    %575 = vmatpush1.bf16.msra.mxu0 %v531
    %576 = vmatprep.subr.bf16.mxu0 0
    %577 = vmatpush1.bf16.msra.mxu0 %v530
    %578 = vmatprep.subr.bf16.mxu0 0
    %579 = vmatpush2.bf16.msra.mxu0 %v545
    %580 = vmatprep.subr.bf16.mxu0 0
    %581 = vmatpush2.bf16.msra.mxu0 %v544
    %582 = vmatprep.subr.bf16.mxu0 0
    %583 = vmatpush2.bf16.msra.mxu0 %v543
    %584 = vmatprep.subr.bf16.mxu0 0
    %585 = vmatpush2.bf16.msra.mxu0 %v542
    %586 = vmatprep.subr.bf16.mxu0 0
    %587 = vmatpush2.bf16.msra.mxu0 %v541
    %588 = vmatprep.subr.bf16.mxu0 0
    %589 = vmatpush2.bf16.msra.mxu0 %v540
    %590 = vmatprep.subr.bf16.mxu0 0
    %591 = vmatpush2.bf16.msra.mxu0 %v539
    %592 = vmatprep.subr.bf16.mxu0 0
    %593 = vmatpush2.bf16.msra.mxu0 %v538
    %594 = vmatprep.mubr.bf16.mxu0 %v426
    %595 = vmatmul.mubr.bf16.gmra.mxu0 %v425
    %v596 = vpop.f32.mrf.mxu0
    %v597 = vadd.f32 %v464, %v596
    %v598 = vpop.f32.mrf.mxu0
    %v599 = vpop.f32.mrf.mxu0
    %v600 = vpop.f32.mrf.mxu0
    %601 = vdwg.mxu0
    %602 = vst [vmem:[%s6] sm:$0xff] %v597
    // Predicated region
    $region30: #{_lambda_.1} parent=1 // pred_check
      _
    $region31: #{_lambda_.1} parent=1 // pred_check_branch
      %604 = sbr.rel (0) target = $region33
    $region32: #{_lambda_.1} parent=1 // pred_region
      _
    $region33: #{_lambda_.1} parent=1 // pred_fallthru
      _
    // Predicated region
    $region34: #{_lambda_.1} parent=1 // pred_check
      _
    $region35: #{_lambda_.1} parent=1 // pred_check_branch
      %606 = sbr.rel (0) target = $region37
    $region36: #{_lambda_.1} parent=1 // pred_region
      _
    $region37: #{_lambda_.1} parent=1 // pred_fallthru
      _
    %607 = vsyncpa [#allocation3], 1

</llo_original>
